<compile_context>
chip_gen: v5e
topology: v5e:2x2
jax: 0.10.0
libtpu: 0.0.40
codegen_flags: <defaults>
</compile_context>

<pallas_src>
import functools

import jax
import jax.numpy as jnp
from jax.experimental import pallas as pl
from jax.experimental.pallas import tpu as pltpu


def _focal_loss_kernel(logits_ref, target_ref, out_ref, *, gamma, hw_valid, mask_oob):
    # logits block: (1, C, t_s, 128) -> classes on the leading (non-tiled) dim,
    # pixels packed densely over (sublane, lane).
    h = pl.program_id(1)

    @pl.when(h == 0)
    def _init():
        out_ref[...] = jnp.zeros_like(out_ref)

    x = logits_ref[0].astype(jnp.float32)            # (C, t_s, 128)
    t = target_ref[0]                                # (1, t_s, 128) int32
    C, t_s, lanes = x.shape

    valid = None
    if mask_oob:
        # Global pixel index of every (sublane, lane) slot in this block;
        # anything >= H*W is padding / ragged-block garbage and must not
        # contribute (and must not feed exp() with junk -> mask logits first).
        sub = jax.lax.broadcasted_iota(jnp.int32, (1, t_s, lanes), 1)
        lane = jax.lax.broadcasted_iota(jnp.int32, (1, t_s, lanes), 2)
        pix = (h * t_s + sub) * lanes + lane
        valid = pix < hw_valid
        x = jnp.where(valid, x, 0.0)

    # log_softmax over the class (leading) axis: pure elementwise slab ops.
    m = jnp.max(x, axis=0, keepdims=True)            # (1, t_s, 128)
    shifted = x - m
    sumexp = jnp.sum(jnp.exp(shifted), axis=0, keepdims=True)

    # gather(1, target) via a one-hot select over the class axis.
    cls = jax.lax.broadcasted_iota(jnp.int32, x.shape, 0)        # (C, t_s, 128)
    z = jnp.sum(jnp.where(cls == t, shifted, 0.0), axis=0, keepdims=True)

    logpt = z - jnp.log(sumexp)                      # (1, t_s, 128)
    pt = jnp.exp(logpt)
    one_minus_pt = 1.0 - pt

    g = float(gamma)
    if g.is_integer() and g >= 0:
        gi = int(g)
        if gi == 0:
            # gamma=0 -> focal == 1, matching torch's (1-pt)**0 == 1.
            focal = jnp.ones_like(pt)
        else:
            focal = one_minus_pt
            for _ in range(gi - 1):
                focal = focal * one_minus_pt          # plain VPU multiplies
    else:
        focal = one_minus_pt ** g                     # EUP log+exp path

    loss = -(focal * logpt)                           # (1, t_s, 128)
    if mask_oob:
        loss = jnp.where(valid, loss, 0.0)

    # Partial reduce inside the kernel: collapse the sublane axis and
    # accumulate per-lane sums into the resident per-sample output block.
    out_ref[...] += jnp.sum(loss, axis=1, keepdims=True)   # (1, 1, 128)


def _round_up(x, m):
    return ((x + m - 1) // m) * m


def focal_loss(logits_nchw, target_nhw, *, gamma=0.0, size_average=False,
               block_sublanes=None, vmem_budget_bytes=8 << 20):
    """logits_nchw: (N, C, H, W) float; target_nhw: (N, H, W) int."""
    N, C, H, W = logits_nchw.shape
    HW = H * W

    # Pure row-major reshapes (no transpose): (N,C,H,W) -> (N,C,HW) -> (N,C,HW/128,128).
    logits3 = logits_nchw.reshape(N, C, HW)
    target3 = target_nhw.reshape(N, 1, HW).astype(jnp.int32)

    # Need >= 8 full sublane rows of 128 lanes; pad only when HW is not already
    # a multiple of 128 (typical segmentation shapes take the free path).
    hw_pad = max(_round_up(HW, 128), 8 * 128)
    if hw_pad != HW:
        # TODO(synk): padding costs one extra pass over these (small-HW) tensors.
        logits3 = jnp.pad(logits3, ((0, 0), (0, 0), (0, hw_pad - HW)))
        target3 = jnp.pad(target3, ((0, 0), (0, 0), (0, hw_pad - HW)))
    S = hw_pad // 128

    logits4 = logits3.reshape(N, C, S, 128)
    target4 = target3.reshape(N, 1, S, 128)

    # Tile size in sublane rows (each row = 128 pixels).  Keep the
    # double-buffered logits+target blocks inside a conservative VMEM budget.
    if block_sublanes is None:
        per_sublane_bytes = (C + 1) * 128 * 4
        t_s = vmem_budget_bytes // (2 * per_sublane_bytes)
        t_s = max(8, min(t_s, 4096))
        t_s = (t_s // 8) * 8
    else:
        t_s = block_sublanes
    t_s = min(t_s, (S // 8) * 8)          # multiple of 8, never larger than the array

    n_blk = pl.cdiv(S, t_s)
    mask_oob = (n_blk * t_s * 128) != HW  # padding and/or ragged last block

    kernel = functools.partial(_focal_loss_kernel, gamma=float(gamma),
                               hw_valid=HW, mask_oob=mask_oob)

    partials = pl.pallas_call(
        kernel,
        out_shape=jax.ShapeDtypeStruct((N, 1, 128), jnp.float32),
        grid_spec=pltpu.PrefetchScalarGridSpec(
            num_scalar_prefetch=0,
            grid=(N, n_blk),
            in_specs=[
                pl.BlockSpec((1, C, t_s, 128), lambda n, h: (n, 0, h, 0)),
                pl.BlockSpec((1, 1, t_s, 128), lambda n, h: (n, 0, h, 0)),
            ],
            # Same block index across the HW axis -> resident accumulator.
            out_specs=pl.BlockSpec((1, 1, 128), lambda n, h: (n, 0, 0)),
        ),
        compiler_params=pltpu.CompilerParams(
            dimension_semantics=("parallel", "arbitrary")),
    )(logits4, target4)

    total = jnp.sum(partials)             # (N, 1, 128) -> scalar: tiny
    if size_average:
        return total / (N * HW)
    return total


def _focal_loss_ref(logits_nchw, target_nhw, *, gamma=0.0, size_average=False):
    N, C, H, W = logits_nchw.shape
    x = jnp.transpose(logits_nchw, (0, 2, 3, 1)).reshape(-1, C).astype(jnp.float32)
    t = target_nhw.reshape(-1).astype(jnp.int32)
    logp = jax.nn.log_softmax(x, axis=1)
    logpt = jnp.take_along_axis(logp, t[:, None], axis=1)[:, 0]
    pt = jnp.exp(logpt)
    loss = -((1.0 - pt) ** gamma) * logpt
    return loss.mean() if size_average else loss.sum()


if __name__ == "__main__":
    key = jax.random.PRNGKey(0)
    k1, k2 = jax.random.split(key)

    N, C, H, W = 2, 4, 16, 16          # M = N*H*W = 512 pixels
    logits = jax.random.normal(k1, (N, C, H, W), dtype=jnp.float32)
    targets = jax.random.randint(k2, (N, H, W), 0, C, dtype=jnp.int32)

    # gamma = 2 (integer fast path), sum reduction.
    out = focal_loss(logits, targets, gamma=2.0, size_average=False)
    out = jax.block_until_ready(out)
    ref = _focal_loss_ref(logits, targets, gamma=2.0, size_average=False)
    assert jnp.allclose(out, ref, rtol=1e-4, atol=1e-4), (out, ref)

    # gamma = 0 (plain CE), mean reduction.
    out2 = focal_loss(logits, targets, gamma=0.0, size_average=True)
    out2 = jax.block_until_ready(out2)
    ref2 = _focal_loss_ref(logits, targets, gamma=0.0, size_average=True)
    assert jnp.allclose(out2, ref2, rtol=1e-4, atol=1e-4), (out2, ref2)

    print("KERNEL_OK")
</pallas_src>

<mosaic_0001>
module attributes {stable_mosaic.version = 11 : i64} {
  func.func @_focal_loss_kernel(%arg0: i32, %arg1: i32, %arg2: memref<1x4x8x128xf32, #tpu.memory_space<vmem>>, %arg3: memref<1x1x8x128xi32, #tpu.memory_space<vmem>>, %arg4: memref<1x1x128xf32, #tpu.memory_space<vmem>>) attributes {dimension_semantics = [#tpu.dimension_semantics<parallel>, #tpu.dimension_semantics<arbitrary>], iteration_bounds = array<i64: 2, 1>, scalar_prefetch = 0 : i64, scratch_operands = 0 : i64, tpu.core_type = #tpu.core_type<tc>, window_params = [{transform_indices = @transform_0, window_bounds = array<i64: 1, 4, 8, 128>}, {transform_indices = @transform_1, window_bounds = array<i64: 1, 1, 8, 128>}, {transform_indices = @transform_2, window_bounds = array<i64: 1, 1, 128>}]} {
    %c0_i32 = arith.constant 0 : i32
    %0 = arith.cmpi eq, %arg1, %c0_i32 : i32
    %1 = arith.extui %0 : i1 to i32
    %c0_i32_0 = arith.constant 0 : i32
    %2 = arith.cmpi ne, %1, %c0_i32_0 : i32
    scf.if %2 {
      %cst_22 = arith.constant 0.000000e+00 : f32
      %51 = vector.broadcast %cst_22 : f32 to vector<1x1x128xf32>
      %c0_23 = arith.constant 0 : index
      %c0_24 = arith.constant 0 : index
      %c0_25 = arith.constant 0 : index
      %52 = vector.load %arg4[%c0_23, %c0_24, %c0_25] : memref<1x1x128xf32, #tpu.memory_space<vmem>>, vector<1x1x128xf32>
      tpu.vector_store %arg4[%c0_23, %c0_24, %c0_25], %51 {strides = array<i32>} : memref<1x1x128xf32, #tpu.memory_space<vmem>>, vector<1x1x128xf32>,
    } else {
    }
    %c0 = arith.constant 0 : index
    %c0_1 = arith.constant 0 : index
    %c0_2 = arith.constant 0 : index
    %c0_3 = arith.constant 0 : index
    %3 = vector.load %arg2[%c0, %c0_1, %c0_2, %c0_3] : memref<1x4x8x128xf32, #tpu.memory_space<vmem>>, vector<1x4x8x128xf32>
    %4 = vector.shape_cast %3 : vector<1x4x8x128xf32> to vector<4x8x128xf32>
    %c0_4 = arith.constant 0 : index
    %c0_5 = arith.constant 0 : index
    %c0_6 = arith.constant 0 : index
    %c0_7 = arith.constant 0 : index
    %5 = vector.load %arg3[%c0_4, %c0_5, %c0_6, %c0_7] : memref<1x1x8x128xi32, #tpu.memory_space<vmem>>, vector<1x1x8x128xi32>
    %6 = vector.shape_cast %5 : vector<1x1x8x128xi32> to vector<1x8x128xi32>
    %7 = tpu.iota {dimensions = array<i32: 1>} : vector<1x8x128xi32>
    %8 = tpu.iota {dimensions = array<i32: 2>} : vector<1x8x128xi32>
    %c8_i32 = arith.constant 8 : i32
    %9 = arith.muli %arg1, %c8_i32 : i32
    %10 = vector.broadcast %9 : i32 to vector<1x8x128xi32>
    %11 = arith.addi %10, %7 : vector<1x8x128xi32>
    %c128_i32 = arith.constant 128 : i32
    %12 = vector.broadcast %c128_i32 : i32 to vector<1x8x128xi32>
    %13 = arith.muli %11, %12 : vector<1x8x128xi32>
    %14 = arith.addi %13, %8 : vector<1x8x128xi32>
    %c256_i32 = arith.constant 256 : i32
    %15 = vector.broadcast %c256_i32 : i32 to vector<1x8x128xi32>
    %16 = arith.cmpi slt, %14, %15 : vector<1x8x128xi32>
    %cst = arith.constant 0.000000e+00 : f32
    %17 = vector.shape_cast %16 : vector<1x8x128xi1> to vector<1x8x128xi1>
    %18 = vector.broadcast %17 : vector<1x8x128xi1> to vector<4x8x128xi1>
    %19 = vector.broadcast %cst : f32 to vector<4x8x128xf32>
    %20 = arith.select %18, %4, %19 : vector<4x8x128xi1>, vector<4x8x128xf32>
    %cst_8 = arith.constant dense<0xFF800000> : vector<8x128xf32>
    %21 = vector.multi_reduction <maximumf>, %20, %cst_8 [0] : vector<4x8x128xf32> to vector<8x128xf32>
    %22 = vector.shape_cast %21 : vector<8x128xf32> to vector<1x8x128xf32>
    %23 = vector.broadcast %22 : vector<1x8x128xf32> to vector<4x8x128xf32>
    %24 = arith.subf %20, %23 : vector<4x8x128xf32>
    %25 = math.exp %24 : vector<4x8x128xf32>
    %cst_9 = arith.constant dense<0.000000e+00> : vector<8x128xf32>
    %26 = vector.multi_reduction <add>, %25, %cst_9 [0] : vector<4x8x128xf32> to vector<8x128xf32>
    %27 = vector.shape_cast %26 : vector<8x128xf32> to vector<1x8x128xf32>
    %28 = tpu.iota {dimensions = array<i32: 0>} : vector<4x8x128xi32>
    %29 = vector.broadcast %6 : vector<1x8x128xi32> to vector<4x8x128xi32>
    %30 = arith.cmpi eq, %28, %29 : vector<4x8x128xi32>
    %cst_10 = arith.constant 0.000000e+00 : f32
    %31 = vector.broadcast %cst_10 : f32 to vector<4x8x128xf32>
    %32 = arith.select %30, %24, %31 : vector<4x8x128xi1>, vector<4x8x128xf32>
    %cst_11 = arith.constant dense<0.000000e+00> : vector<8x128xf32>
    %33 = vector.multi_reduction <add>, %32, %cst_11 [0] : vector<4x8x128xf32> to vector<8x128xf32>
    %34 = vector.shape_cast %33 : vector<8x128xf32> to vector<1x8x128xf32>
    %35 = math.log %27 : vector<1x8x128xf32>
    %36 = arith.subf %34, %35 : vector<1x8x128xf32>
    %37 = math.exp %36 : vector<1x8x128xf32>
    %cst_12 = arith.constant 1.000000e+00 : f32
    %38 = vector.broadcast %cst_12 : f32 to vector<1x8x128xf32>
    %39 = arith.subf %38, %37 : vector<1x8x128xf32>
    %40 = arith.mulf %39, %39 : vector<1x8x128xf32>
    %41 = arith.mulf %40, %36 : vector<1x8x128xf32>
    %cst_13 = arith.constant 0.000000e+00 : f32
    %42 = vector.broadcast %cst_13 : f32 to vector<1x8x128xf32>
    %43 = arith.subf %42, %41 : vector<1x8x128xf32>
    %cst_14 = arith.constant 0.000000e+00 : f32
    %44 = vector.broadcast %cst_14 : f32 to vector<1x8x128xf32>
    %45 = arith.select %16, %43, %44 : vector<1x8x128xi1>, vector<1x8x128xf32>
    %c0_15 = arith.constant 0 : index
    %c0_16 = arith.constant 0 : index
    %c0_17 = arith.constant 0 : index
    %46 = vector.load %arg4[%c0_15, %c0_16, %c0_17] : memref<1x1x128xf32, #tpu.memory_space<vmem>>, vector<1x1x128xf32>
    %cst_18 = arith.constant dense<0.000000e+00> : vector<1x128xf32>
    %47 = vector.multi_reduction <add>, %45, %cst_18 [1] : vector<1x8x128xf32> to vector<1x128xf32>
    %48 = vector.shape_cast %47 : vector<1x128xf32> to vector<1x1x128xf32>
    %49 = arith.addf %46, %48 : vector<1x1x128xf32>
    %c0_19 = arith.constant 0 : index
    %c0_20 = arith.constant 0 : index
    %c0_21 = arith.constant 0 : index
    %50 = vector.load %arg4[%c0_19, %c0_20, %c0_21] : memref<1x1x128xf32, #tpu.memory_space<vmem>>, vector<1x1x128xf32>
    tpu.vector_store %arg4[%c0_19, %c0_20, %c0_21], %49 {strides = array<i32>} : memref<1x1x128xf32, #tpu.memory_space<vmem>>, vector<1x1x128xf32>,
    return
  }
  func.func @transform_0(%arg0: i32, %arg1: i32) -> (i32, i32, i32, i32) {
    %c0_i32 = arith.constant 0 : i32
    %c0_i32_0 = arith.constant 0 : i32
    %c0_i32_1 = arith.constant 0 : i32
    return %arg0, %c0_i32, %arg1, %c0_i32_0 : i32, i32, i32, i32
  }
  func.func @transform_1(%arg0: i32, %arg1: i32) -> (i32, i32, i32, i32) {
    %c0_i32 = arith.constant 0 : i32
    %c0_i32_0 = arith.constant 0 : i32
    %c0_i32_1 = arith.constant 0 : i32
    return %arg0, %c0_i32, %arg1, %c0_i32_0 : i32, i32, i32, i32
  }
  func.func @transform_2(%arg0: i32, %arg1: i32) -> (i32, i32, i32) {
    %c0_i32 = arith.constant 0 : i32
    %c0_i32_0 = arith.constant 0 : i32
    %c0_i32_1 = arith.constant 0 : i32
    return %arg0, %c0_i32, %c0_i32_0 : i32, i32, i32
  }
}

</mosaic_0001>

<llo_original>
// kernel: tpu_custom_call.1
$region0: #{tpu_custom_call.1}
  #allocation0 [shape = 'u32[]', space=smem, size = 0x4, offset = 0x4, fixed_abs, tag = 'smem constant byte address 0x4 - core index']
  #allocation1 [shape = 'u32[72,128]{1,0:T(1,128)}', space=vmem, size = 0x9000, scoped, tag = 'internal scratch']
  %s0 = inlined_call_operand.hbm [shape: f32[2,4,8,128], index: 0, kind: input, shape index: {}]
  %s1 = inlined_call_operand.hbm [shape: s32[2,1,8,128], index: 1, kind: input, shape index: {}]
  %s2 = inlined_call_operand.hbm [shape: f32[2,1,128], index: 2, kind: output, shape index: {}]
  %s3 = sld [smem:[#allocation0]]
  $region53: #{tpu_custom_call.1} parent=0
    _
  %s5 = ssub.s32 1, %s3
  %s6 = scalar_select 0, %s5, %s3
  $region1: #{tpu_custom_call.1} parent=0
    #allocation2 [shape = 'u8[32768]{0}', space=vmem, size = 0x8000, scoped, tag = 'input window, operand 0']
    #allocation3 [shape = 's32[2]{0}', space=sflag, size = 0x8, scoped, tag = 'scoped memory for tpu_custom_call.1']
    #allocation4 [shape = 's32[2]{0}', space=sflag, size = 0x8, scoped, tag = 'scoped memory for tpu_custom_call.1']
    #allocation5 [shape = 'u8[8192]{0}', space=vmem, size = 0x2000, scoped, tag = 'input window, operand 1']
    #allocation6 [shape = 's32[2]{0}', space=sflag, size = 0x8, scoped, tag = 'scoped memory for tpu_custom_call.1']
    #allocation7 [shape = 'u8[1024]{0}', space=vmem, size = 0x400, scoped, tag = 'output window, operand 0']
    %7 = vsyncpa [#allocation3], 0
    %s8 = scalar_lea.sflag [#allocation3], 1
    %9 = vsyncpa %s8, 0
    %10 = vsyncpa [#allocation6], 0
    %s11 = scalar_lea.sflag [#allocation6], 1
    %12 = vsyncpa %s11, 0
    %13 = vsyncpa [#allocation4], 0
    %s14 = scalar_lea.sflag [#allocation4], 1
    %15 = vsyncpa %s14, 0
    loop: start=0, step=1, limit=4
    $region2: #{tpu_custom_call.1} parent=1 // loop_pre_header
      _
    $region3: #{tpu_custom_call.1} parent=1 // loop_header
      %s17 = sphi 0, %s21
      %p18 = scmp.ge.s32.totalorder %s17, 4
      %s24 = sphi 0, %s36
      %s25 = sphi 0, %s32
      %s26 = sphi 0, %s24
      %s27 = sphi 0, %s25
      %s28 = sphi 0, %s26
      %s29 = sphi 0, %s27
      %s41 = sphi 0, %s43
      %s44 = sphi 0, %s41
      %s45 = sphi 0, %s44
      %s61 = sphi 0, %s45
      %s69 = sphi 0, %s71
      %s72 = sphi 0, %s69
      %s73 = sphi 0, %s72
      %s89 = sphi 0, %s73
      %s95 = sphi 0, %s97
      %s98 = sphi 0, %s95
      %s99 = sphi 0, %s98
      %s115 = sphi 0, %s99
    $region4: #{tpu_custom_call.1} parent=1 // loop_header_branch
      %20 = sbr.rel (%p18) target = $region8
    $region5: #{tpu_custom_call.1} parent=1 // loop_body
      %s22 = ssub.s32 %s17, 1
      %s23 = ssub.s32 %s17, 2
      %s30 = sadd.s32 1, %s25
      %p31 = scmp.ge.s32.totalorder %s30, 1
      %s32 = scalar_select %p31, 0, %s30
      %s33 = sadd.s32 1, %s24
      %s34 = scalar_select %p31, %s33, %s24
      %p35 = scmp.ge.s32.totalorder %s34, 2
      %s36 = scalar_select %p35, 0, %s34
      %s37 = ssub.s32 %s24, %s36
      %s38 = ssub.s32 %s25, %s32
      %s39 = sor.u32 %s37, %s38
      %p40 = scmp.eq.s32.totalorder %s39, 0
      %s42 = sadd.s32 %s41, 1
      %s43 = scalar_select %p40, %s41, %s42
      %p46 = pneg %p40
      %p47 = scmp.eq.s32.totalorder %s17, 1
      %p48 = por %p46, %p47
      %p49 = scmp.ne.s32.totalorder %s41, %s44
      %p50 = scmp.eq.s32.totalorder %s17, 0
      %p51 = por %p49, %p50
      %p52 = scmp.ne.s32.totalorder %s41, %s44
      %p53 = scmp.eq.s32.totalorder %s22, 1
      %p54 = por %p52, %p53
      %p55 = scmp.ne.s32.totalorder %s44, %s45
      %p56 = scmp.eq.s32.totalorder %s22, 0
      %p57 = por %p55, %p56
      %p58 = scmp.ne.s32.totalorder %s44, %s45
      %p59 = scmp.eq.s32.totalorder %s23, 1
      %p60 = por %p58, %p59
      %p62 = scmp.ne.s32.totalorder %s45, %s61
      %p63 = scmp.eq.s32.totalorder %s23, 0
      %p64 = por %p62, %p63
      %s65 = ssub.s32 %s24, %s36
      %s66 = ssub.s32 %s25, %s32
      %s67 = sor.u32 %s65, %s66
      %p68 = scmp.eq.s32.totalorder %s67, 0
      %s70 = sadd.s32 %s69, 1
      %s71 = scalar_select %p68, %s69, %s70
      %p74 = pneg %p68
      %p75 = scmp.eq.s32.totalorder %s17, 1
      %p76 = por %p74, %p75
      %p77 = scmp.ne.s32.totalorder %s69, %s72
      %p78 = scmp.eq.s32.totalorder %s17, 0
      %p79 = por %p77, %p78
      %p80 = scmp.ne.s32.totalorder %s69, %s72
      %p81 = scmp.eq.s32.totalorder %s22, 1
      %p82 = por %p80, %p81
      %p83 = scmp.ne.s32.totalorder %s72, %s73
      %p84 = scmp.eq.s32.totalorder %s22, 0
      %p85 = por %p83, %p84
      %p86 = scmp.ne.s32.totalorder %s72, %s73
      %p87 = scmp.eq.s32.totalorder %s23, 1
      %p88 = por %p86, %p87
      %p90 = scmp.ne.s32.totalorder %s73, %s89
      %p91 = scmp.eq.s32.totalorder %s23, 0
      %p92 = por %p90, %p91
      %s93 = ssub.s32 %s24, %s36
      %p94 = scmp.eq.s32.totalorder %s93, 0
      %s96 = sadd.s32 %s95, 1
      %s97 = scalar_select %p94, %s95, %s96
      %p100 = pneg %p94
      %p101 = scmp.eq.s32.totalorder %s17, 1
      %p102 = por %p100, %p101
      %p103 = scmp.ne.s32.totalorder %s95, %s98
      %p104 = scmp.eq.s32.totalorder %s17, 0
      %p105 = por %p103, %p104
      %p106 = scmp.ne.s32.totalorder %s95, %s98
      %p107 = scmp.eq.s32.totalorder %s22, 1
      %p108 = por %p106, %p107
      %p109 = scmp.ne.s32.totalorder %s98, %s99
      %p110 = scmp.eq.s32.totalorder %s22, 0
      %p111 = por %p109, %p110
      %p112 = scmp.ne.s32.totalorder %s98, %s99
      %p113 = scmp.eq.s32.totalorder %s23, 1
      %p114 = por %p112, %p113
      %p116 = scmp.ne.s32.totalorder %s99, %s115
      %p117 = scmp.eq.s32.totalorder %s23, 0
      %p118 = por %p116, %p117
      %p119 = scmp.le.s32.totalorder 1, %s17
      %p120 = scmp.lt.s32.totalorder %s17, 3
      %p121 = pnand %p119, %p120
      %p122 = pneg %p121
      // Predicated region
      $region9: #{tpu_custom_call.1} parent=5 // pred_check
        _
      $region10: #{tpu_custom_call.1} parent=5 // pred_check_branch
        %124 = sbr.rel (%p121) target = $region12
      $region11: #{tpu_custom_call.1} parent=5 // pred_region
        %s125 = ssub.s32 %s17, 1
      $region12: #{tpu_custom_call.1} parent=5 // pred_fallthru
        _
      %p126 = scmp.lt.s32.totalorder %s17, 2
      // Predicated region
      $region13: #{tpu_custom_call.1} parent=5 // pred_check
        %p127 = pneg %p126
      $region14: #{tpu_custom_call.1} parent=5 // pred_check_branch
        %129 = sbr.rel (%p127) target = $region16
      $region15: #{tpu_custom_call.1} parent=5 // pred_region
        // Predicated region
        $region17: #{tpu_custom_call.1} parent=15 // pred_check
          %p130 = pneg %p51
        $region18: #{tpu_custom_call.1} parent=15 // pred_check_branch
          %132 = sbr.rel (%p130) target = $region20
        $region19: #{tpu_custom_call.1} parent=15 // pred_region
          %s133 = sand.u32 %s41, 1
          %s134 = scalar_lea.sflag [#allocation3], %s133
          %s135 = sand.u32 %s41, 1
          %s136 = smul.addr %s135, 32
          %s137 = scalar_lea.vmem [#allocation2], %s136
          %139 = vsyncadd %s134, 0
          %s140 = smul.addr %s24, 4
          %s141 = sadd.s32 %s25, %s140
          %s142 = smul.addr %s141, 8
          %s143 = scalar_lea.hbm %s0, %s142
          %s144 = sshll.u32 %s143, 4
          %s145 = int_to_ptr.hbm [resolvable:$true] %s144
          %s146 = sshll.u32 %s137, 4
          %s147 = int_to_ptr.vmem [resolvable:$true] %s146
          %152 = dma.hbm_to_vmem [thread:$0]  %s145, 512, %s147, %s134, 128, 128, 8
        $region20: #{tpu_custom_call.1} parent=15 // pred_fallthru
          _
        // Predicated region
        $region21: #{tpu_custom_call.1} parent=15 // pred_check
          %p153 = pneg %p79
        $region22: #{tpu_custom_call.1} parent=15 // pred_check_branch
          %155 = sbr.rel (%p153) target = $region24
        $region23: #{tpu_custom_call.1} parent=15 // pred_region
          %s156 = sand.u32 %s69, 1
          %s157 = scalar_lea.sflag [#allocation6], %s156
          %s158 = sand.u32 %s69, 1
          %s159 = smul.addr %s158, 8
          %s160 = scalar_lea.vmem [#allocation5], %s159
          %162 = vsyncadd %s157, 0
          %s163 = sadd.s32 %s25, %s24
          %s164 = smul.addr %s163, 8
          %s165 = scalar_lea.hbm %s1, %s164
          %s167 = sshll.u32 %s165, 4
          %s168 = int_to_ptr.hbm [resolvable:$true] %s167
          %s169 = sshll.u32 %s160, 4
          %s170 = int_to_ptr.vmem [resolvable:$true] %s169
          %172 = dma.hbm_to_vmem [thread:$0]  %s168, 128, %s170, %s157
        $region24: #{tpu_custom_call.1} parent=15 // pred_fallthru
          _
      $region16: #{tpu_custom_call.1} parent=5 // pred_fallthru
        _
      %p173 = scmp.le.s32.totalorder 1, %s17
      %p174 = scmp.lt.s32.totalorder %s17, 3
      %p175 = pnand %p173, %p174
      %p176 = pneg %p175
      // Predicated region
      $region25: #{tpu_custom_call.1} parent=5 // pred_check
        _
      $region26: #{tpu_custom_call.1} parent=5 // pred_check_branch
        %178 = sbr.rel (%p175) target = $region28
      $region27: #{tpu_custom_call.1} parent=5 // pred_region
        %s179 = ssub.s32 %s17, 1
        %s180 = sand.u32 %s44, 1
        %s181 = scalar_lea.sflag [#allocation3], %s180
        %s182 = sand.u32 %s44, 1
        %s183 = smul.addr %s182, 32
        %s184 = scalar_lea.vmem [#allocation2], %s183
        // Predicated region
        $region29: #{tpu_custom_call.1} parent=27 // pred_check
          %p185 = pneg %p57
        $region30: #{tpu_custom_call.1} parent=27 // pred_check_branch
          %187 = sbr.rel (%p185) target = $region32
        $region31: #{tpu_custom_call.1} parent=27 // pred_region
          %189 = dma.done %s181, 512
        $region32: #{tpu_custom_call.1} parent=27 // pred_fallthru
          _
        %s190 = sand.u32 %s72, 1
        %s191 = scalar_lea.sflag [#allocation6], %s190
        %s192 = sand.u32 %s72, 1
        %s193 = smul.addr %s192, 8
        %s194 = scalar_lea.vmem [#allocation5], %s193
        // Predicated region
        $region33: #{tpu_custom_call.1} parent=27 // pred_check
          %p195 = pneg %p85
        $region34: #{tpu_custom_call.1} parent=27 // pred_check_branch
          %197 = sbr.rel (%p195) target = $region36
        $region35: #{tpu_custom_call.1} parent=27 // pred_region
          %199 = dma.done %s191, 128
        $region36: #{tpu_custom_call.1} parent=27 // pred_fallthru
          _
        %s200 = sand.u32 %s44, 1
        %s201 = scalar_lea.sflag [#allocation3], %s200
        %s202 = sand.u32 %s44, 1
        %s203 = smul.addr %s202, 32
        %s204 = scalar_lea.vmem [#allocation2], %s203
        %p205 = pneg %p57
        %p206 = pneg %p54
        %s207 = sand.u32 %s72, 1
        %s208 = scalar_lea.sflag [#allocation6], %s207
        %s209 = sand.u32 %s72, 1
        %s210 = smul.addr %s209, 8
        %s211 = scalar_lea.vmem [#allocation5], %s210
        %p212 = pneg %p85
        %p213 = pneg %p82
        %p214 = pneg %p111
        %p215 = pneg %p108
        %s216 = sand.u32 %s98, 1
        %s217 = scalar_lea.sflag [#allocation4], %s216
        %s218 = sand.u32 %s98, 1
        %s219 = scalar_lea.vmem [#allocation7], %s218
        %p220 = scmp.eq.s32.totalorder %s27, 0
        // Predicated region
        $region37: #{tpu_custom_call.1} parent=27 // pred_check
          %p221 = pneg %p220
        $region38: #{tpu_custom_call.1} parent=27 // pred_check_branch
          %223 = sbr.rel (%p221) target = $region40
        $region39: #{tpu_custom_call.1} parent=27 // pred_region
          %224 = vst [vmem:[%s219] sm:$0x1] 0.0
        $region40: #{tpu_custom_call.1} parent=27 // pred_fallthru
          _
        %v225 = vld [vmem:[%s184] sm:$0xff]
        %v226 = vld [vmem:[%s184 + $0x8] sm:$0xff]
        %v227 = vld [vmem:[%s184 + $0x10] sm:$0xff]
        %v228 = vld [vmem:[%s184 + $0x18] sm:$0xff]
        %v229 = vld [vmem:[%s194] sm:$0xff]
        %v230 = vlaneseq
        %v231 = vshrl.u32 %v230, 7
        %v232 = vlaneseq
        %v233 = vand.u32 %v232, 127
        %s234 = smul.u32 %s27, 8
        %v235 = vstv %s234
        %v236 = vadd.s32 %v235, %v231
        %v237 = vmul.u32 %v236, 128
        %v238 = vadd.s32 %v237, %v233
        %vm239 = vcmp.lt.s32.totalorder %v238, 256
        %v240 = vsel %vm239, 1, 0
        %vm241 = vcmp.eq.s32.totalorder %v240, 1
        %v242 = vsel %vm241, %v225, 0.0
        %v243 = vsel %vm241, %v226, 0.0
        %v244 = vsel %vm241, %v227, 0.0
        %v245 = vsel %vm241, %v228, 0.0
        %v246 = vmax.f32 %v242, %v243
        %v247 = vmax.f32 %v244, %v245
        %v248 = vmax.f32 %v246, %v247
        %v249 = vsub.f32 %v242, %v248
        %v250 = vsub.f32 %v243, %v248
        %v251 = vsub.f32 %v244, %v248
        %v252 = vsub.f32 %v245, %v248
        %v253 = vmul.f32 %v249, 1.442695
        %v254 = vpow.pop %v253
        %v255 = vmul.f32 %v250, 1.442695
        %v256 = vpow.pop %v255
        %v257 = vmul.f32 %v251, 1.442695
        %v258 = vpow.pop %v257
        %v259 = vmul.f32 %v252, 1.442695
        %v260 = vpow.pop %v259
        %v261 = vadd.f32 %v254, %v256
        %v262 = vadd.f32 %v261, %v258
        %v263 = vadd.f32 %v262, %v260
        %vm264 = vcmp.eq.s32.totalorder %v229, 0
        %vm265 = vcmp.eq.s32.totalorder %v229, 1
        %vm266 = vcmp.eq.s32.totalorder %v229, 2
        %vm267 = vcmp.eq.s32.totalorder %v229, 3
        %v268 = vsel %vm264, %v249, 0.0
        %v269 = vsel %vm265, %v250, 0.0
        %v270 = vsel %vm266, %v251, 0.0
        %v271 = vsel %vm267, %v252, 0.0
        %v272 = vadd.f32 %v268, %v269
        %v273 = vadd.f32 %v272, %v270
        %v274 = vadd.f32 %v273, %v271
        %v275 = vlog2.pop %v263
        %v276 = vmul.f32 %v275, 0.6931472
        %v277 = vsub.f32 %v274, %v276
        %v278 = vmul.f32 %v277, 1.442695
        %v279 = vpow.pop %v278
        %v280 = vsub.f32 1.0, %v279
        %v281 = vmul.f32 %v280, %v280
        %v282 = vmul.f32 %v281, %v277
        %v283 = vsub.f32 0.0, %v282
        %v284 = vsel %vm239, %v283, 0.0
        %v285 = vld [vmem:[%s219] sm:$0x1]
        %v286 = vrot.slane %v284, 4
        %v287 = vadd.f32 %v284, %v286
        %v288 = vrot.slane %v287, 2
        %v289 = vadd.f32 %v287, %v288
        %v290 = vrot.slane %v289, 1
        %v291 = vadd.f32 %v289, %v290
        %v292 = vadd.f32 %v285, %v291
        %293 = vst [vmem:[%s219] sm:$0x1] %v292
        %s294 = sand.u32 %s98, 1
        %s295 = scalar_lea.sflag [#allocation4], %s294
        %s296 = sand.u32 %s98, 1
        %s297 = scalar_lea.vmem [#allocation7], %s296
        // Predicated region
        $region41: #{tpu_custom_call.1} parent=27 // pred_check
          %p298 = pneg %p108
        $region42: #{tpu_custom_call.1} parent=27 // pred_check_branch
          %300 = sbr.rel (%p298) target = $region44
        $region43: #{tpu_custom_call.1} parent=27 // pred_region
          %302 = vsyncadd %s295, 0
          %s303 = scalar_lea.hbm %s2, %s26
          %s305 = sshll.u32 %s297, 4
          %s306 = int_to_ptr.vmem [resolvable:$true] %s305
          %s307 = sshll.u32 %s303, 4
          %s308 = int_to_ptr.hbm [resolvable:$true] %s307
          %310 = dma.vmem_to_hbm [thread:$0]  %s306, 16, %s308, %s295
        $region44: #{tpu_custom_call.1} parent=27 // pred_fallthru
          _
      $region28: #{tpu_custom_call.1} parent=5 // pred_fallthru
        _
      %p311 = scmp.le.s32.totalorder 2, %s17
      // Predicated region
      $region45: #{tpu_custom_call.1} parent=5 // pred_check
        %p312 = pneg %p311
      $region46: #{tpu_custom_call.1} parent=5 // pred_check_branch
        %314 = sbr.rel (%p312) target = $region48
      $region47: #{tpu_custom_call.1} parent=5 // pred_region
        %s315 = ssub.s32 %s17, 2
        // Predicated region
        $region49: #{tpu_custom_call.1} parent=47 // pred_check
          %p316 = pneg %p114
        $region50: #{tpu_custom_call.1} parent=47 // pred_check_branch
          %318 = sbr.rel (%p316) target = $region52
        $region51: #{tpu_custom_call.1} parent=47 // pred_region
          %s319 = sand.u32 %s99, 1
          %s320 = scalar_lea.sflag [#allocation4], %s319
          %s321 = sand.u32 %s99, 1
          %s322 = scalar_lea.vmem [#allocation7], %s321
          %324 = dma.done %s320, 16
        $region52: #{tpu_custom_call.1} parent=47 // pred_fallthru
          _
      $region48: #{tpu_custom_call.1} parent=5 // pred_fallthru
        _
    $region6: #{tpu_custom_call.1} parent=1 // loop_footer
      %s21 = sadd.s32 1, %s17
    $region7: #{tpu_custom_call.1} parent=1 // loop_footer_branch
      %16 = sbr.rel target = $region3
    $region8: #{tpu_custom_call.1} parent=1 // loop_exit
      _
    %325 = vsyncpa [#allocation3], 1
    %s326 = scalar_lea.sflag [#allocation3], 1
    %327 = vsyncpa %s326, 1
    %328 = vsyncpa [#allocation6], 1
    %s329 = scalar_lea.sflag [#allocation6], 1
    %330 = vsyncpa %s329, 1
    %331 = vsyncpa [#allocation4], 1
    %s332 = scalar_lea.sflag [#allocation4], 1
    %333 = vsyncpa %s332, 1

</llo_original>
